<compile_context>
chip_gen: v6e
topology: v6e:2x2x1
jax: 0.10.0
libtpu: 0.0.40
codegen_flags: <defaults>
</compile_context>

<pallas_src>
import math
import numpy as np

import jax
import jax.numpy as jnp
from jax.experimental import pallas as pl
from jax.experimental.pallas import tpu as pltpu


# ----------------------------------------------------------------------------
# Spec helpers (mirror the PyTorch module)
# ----------------------------------------------------------------------------
def extend_conv_spec(convolutions):
    extended = []
    for spec in convolutions:
        if len(spec) == 3:
            extended.append(spec)
        elif len(spec) == 2:
            extended.append(spec + (1,))
        else:
            raise Exception("invalid conv spec " + str(spec))
    return tuple(extended)


def find_subsequence_indices_np(src, src_with_prev):
    """Host-side integer logic, mirrors the PyTorch find_subsequence_indices.
    (Inherits the reference quirk: a match at k == 0 produces an empty slice.)"""
    assert src.shape[0] == src_with_prev.shape[0]
    musk = np.zeros_like(src_with_prev, dtype=np.int32)
    for i in range(src_with_prev.shape[0]):
        musk[i, 0] = 1
        len_prev = src_with_prev.shape[1]
        filtered_src = src[i, 1:]
        lf = filtered_src.shape[0]
        for k in range(len_prev - lf + 1):
            if np.array_equal(src_with_prev[i, k:k + lf], filtered_src):
                musk[i, k - 1:k + lf] = 1
                break
    return musk


# ----------------------------------------------------------------------------
# Parameter init (deterministic, matches the PyTorch init statistics)
# ----------------------------------------------------------------------------
def init_decoder_params(key, vocab_size, embed_dim, convolutions, dropout=0.1):
    convs = extend_conv_spec(convolutions)
    in_channels = convs[0][0]
    keys = jax.random.split(key, 3 + len(convs))

    # fc1: embed_dim -> in_channels (linear(): std = sqrt((1 - dropout)/in_features))
    fc1_w = jax.random.normal(keys[0], (in_channels, embed_dim), jnp.float32) \
        * math.sqrt((1.0 - dropout) / embed_dim)

    # ConvTBC stack: structural parity only; UNUSED by forward() (empty attentions).
    conv_params = []
    c_in = in_channels
    for i, (out_c, K, _res) in enumerate(convs):
        std = math.sqrt(4.0 * (1.0 - dropout) / (K * c_in))
        w = jax.random.normal(keys[1 + i], (K, c_in, 2 * out_c), jnp.float32) * std
        conv_params.append((w, jnp.zeros((2 * out_c,), jnp.float32)))
        c_in = out_c
    out_channels = c_in

    # fcg: (embed_dim + out_channels) -> 1 ; forward() does h = cat([x, target_embedding])
    fcg_w = jax.random.normal(keys[-2], (1, embed_dim + out_channels), jnp.float32) \
        * math.sqrt(1.0 / (embed_dim + out_channels))

    # fc2: out_channels -> len(dictionary)
    fc2_w = jax.random.normal(keys[-1], (vocab_size, out_channels), jnp.float32) \
        * math.sqrt(1.0 / out_channels)

    return {
        "ln_w": jnp.ones((1, embed_dim), jnp.float32),
        "ln_b": jnp.zeros((1, embed_dim), jnp.float32),
        "fc1_w": fc1_w, "fc1_b": jnp.zeros((1, in_channels), jnp.float32),
        "fcg_w": fcg_w, "fcg_b": jnp.zeros((1, 1), jnp.float32),
        "fc2_w": fc2_w, "fc2_b": jnp.zeros((1, vocab_size), jnp.float32),
        "conv_params": conv_params,               # unused in forward (see header note)
    }


def fuse_decoder_params(raw):
    """Fold LayerNorm-affine + fc1 + fc2 + fcg into one (D,V) slab, one (1,V) bias,
    one (1,D) gate vector and a scalar gate bias.  Valid because no nonlinearity runs
    between fc1 and fc2/fcg in forward() (the conv/GLU loop never executes)."""
    C = raw["fc1_w"].shape[0]
    assert raw["fc2_w"].shape[1] == C, "fc1 output width must feed fc2 (conv stack skipped)"
    w1t = raw["fc1_w"].T                              # (D, C)
    w2t = raw["fc2_w"].T                              # (C, V)
    wgx = raw["fcg_w"][:, :C]                         # (1, C)  multiplies fc1 output
    wge = raw["fcg_w"][:, C:]                         # (1, D)  multiplies target_embedding

    w12 = w1t @ w2t                                   # (D, V)  f32 fusion
    b12 = raw["fc1_b"] @ w2t + raw["fc2_b"]           # (1, V)
    wg_te = w1t @ wgx.T + wge.T                       # (D, 1)
    bg = raw["fcg_b"] + raw["fc1_b"] @ wgx.T          # (1, 1)

    ln_w, ln_b = raw["ln_w"], raw["ln_b"]             # fold LN affine into the slabs
    return {
        "w12": (ln_w.T * w12).astype(jnp.bfloat16),   # (D, V) bf16 MXU operand
        "b12": (ln_b @ w12 + b12).astype(jnp.float32),
        "wg": (ln_w * wg_te.T).astype(jnp.float32),   # (1, D)
        "bg": (ln_b @ wg_te + bg).astype(jnp.float32),  # (1, 1) -> SMEM scalar
    }


# ----------------------------------------------------------------------------
# Pallas kernel: fused decoder hot path on a row tile of the flattened slab
# ----------------------------------------------------------------------------
def decoder_kernel(x_ref, w12_ref, b12_ref, wg_ref, bg_ref, out_ref):
    x = x_ref[...]                                    # (TM, D) f32

    # LayerNorm statistics in one pass (affine already folded into w12/b12/wg/bg).
    mean = jnp.mean(x, axis=-1, keepdims=True)
    var = jnp.maximum(jnp.mean(x * x, axis=-1, keepdims=True) - mean * mean, 0.0)
    xn = (x - mean) * jax.lax.rsqrt(var + 1e-5)

    # Pointer gate: fc1 + fcg + LN-affine collapsed into one (1, D) vector + scalar.
    pg = jax.nn.sigmoid(
        jnp.sum(xn * wg_ref[...], axis=-1, keepdims=True) + bg_ref[0, 0])   # (TM, 1)

    # fc1 -> fc2 fused into a single lane-dense matmul (bf16 operands, f32 acc).
    logits = jnp.dot(xn.astype(jnp.bfloat16), w12_ref[...],
                     preferred_element_type=jnp.float32) + b12_ref[...]     # (TM, V)

    # softmax -> * p_gen -> log(. + 1e-32)  (explicit form keeps the 1e-32 floor).
    m = jnp.max(logits, axis=-1, keepdims=True)
    e = jnp.exp(logits - m)
    inv = pl.reciprocal(jnp.sum(e, axis=-1, keepdims=True), approx=True)
    out_ref[...] = jnp.log(e * inv * pg + 1e-32)


def _choose_row_tile(n_rows, d, v, tile_budget_bytes=8 << 20):
    """Row tile: multiple of 16 (bf16 sublane packing), sized so the double-buffered
    f32 input + output tiles stay well inside scoped VMEM on every generation."""
    per_row = 2 * (d + v) * 4
    tm = max(16, min(1024, tile_budget_bytes // max(per_row, 1)))
    tm -= tm % 16
    n16 = ((max(n_rows, 16) + 15) // 16) * 16
    return min(tm, n16)


def decoder_hot_path(x, fused):
    """x: (B, T, D) gathered target embeddings.  Returns (B, T, V) log-probs."""
    B, T, D = x.shape
    V = fused["b12"].shape[-1]
    N = B * T
    TM = _choose_row_tile(N, D, V)
    Np = ((max(N, TM) + TM - 1) // TM) * TM
    x_flat = x.reshape(N, D)
    if Np != N:
        x_flat = jnp.pad(x_flat, ((0, Np - N), (0, 0)))

    weight_bytes = D * V * 2 + V * 4 + D * 4
    tile_bytes = 2 * TM * (D + V) * 4
    vmem_limit = int(min(max(4 * (weight_bytes + tile_bytes), 16 << 20), 64 << 20))

    out = pl.pallas_call(
        decoder_kernel,
        out_shape=jax.ShapeDtypeStruct((Np, V), jnp.float32),
        grid=(Np // TM,),
        in_specs=[
            pl.BlockSpec((TM, D), lambda i: (i, 0)),              # row tile of x
            pl.BlockSpec((D, V), lambda i: (0, 0)),               # fused weight slab (resident)
            pl.BlockSpec((1, V), lambda i: (0, 0)),               # fused bias row (resident)
            pl.BlockSpec((1, D), lambda i: (0, 0)),               # fused gate vector (resident)
            pl.BlockSpec(memory_space=pltpu.MemorySpace.SMEM),    # gate bias scalar in SMEM
        ],
        out_specs=pl.BlockSpec((TM, V), lambda i: (i, 0)),        # lane-dense output tile
        compiler_params=pltpu.CompilerParams(
            dimension_semantics=("parallel",),                    # v7x megacore sharding
            vmem_limit_bytes=vmem_limit),
    )(x_flat, fused["w12"], fused["b12"], fused["wg"], fused["bg"])
    return out[:N].reshape(B, T, V)


# ----------------------------------------------------------------------------
# Pure-JAX references
# ----------------------------------------------------------------------------
def decoder_hot_path_ref(x, fused):
    """Same fused math in plain JAX (tight tolerance vs. the kernel)."""
    mean = jnp.mean(x, axis=-1, keepdims=True)
    var = jnp.maximum(jnp.mean(x * x, axis=-1, keepdims=True) - mean * mean, 0.0)
    xn = (x - mean) * jax.lax.rsqrt(var + 1e-5)
    pg = jax.nn.sigmoid(jnp.sum(xn * fused["wg"], -1, keepdims=True) + fused["bg"][0, 0])
    logits = jnp.dot(xn.astype(jnp.bfloat16), fused["w12"],
                     preferred_element_type=jnp.float32) + fused["b12"]
    return jnp.log(jax.nn.softmax(logits, axis=-1) * pg + 1e-32)


def decoder_ref_unfused(x, raw):
    """Exact module math (unfused, full f32) — validates the algebraic fusion."""
    mean = x.mean(-1, keepdims=True)
    var = ((x - mean) ** 2).mean(-1, keepdims=True)
    te = (x - mean) * jax.lax.rsqrt(var + 1e-5) * raw["ln_w"] + raw["ln_b"]
    x1 = te @ raw["fc1_w"].T + raw["fc1_b"]
    h = jnp.concatenate([x1, te], axis=-1)
    pg = jax.nn.sigmoid(h @ raw["fcg_w"].T + raw["fcg_b"])
    logits = x1 @ raw["fc2_w"].T + raw["fc2_b"]
    return jnp.log(jax.nn.softmax(logits, axis=-1) * pg + 1e-32)


# ----------------------------------------------------------------------------
# Decoder wrapper (host glue + Pallas hot path)
# ----------------------------------------------------------------------------
class Decoder:
    """JAX/Pallas port of the PyTorch Decoder (CGModel)."""

    def __init__(self, key, vocab_size, embed_dim=32,
                 convolutions=((16, 3),) * 2, dropout=0.1):
        self.raw = init_decoder_params(key, vocab_size, embed_dim, convolutions, dropout)
        self.embed_dim = embed_dim
        self.vocab_size = vocab_size
        self.rebuild_fused()

    def rebuild_fused(self):
        self.fused = fuse_decoder_params(self.raw)

    def _split_encoder_out(self, encoder_out):
        encoder_a, encoder_b = encoder_out
        return jnp.transpose(encoder_a, (0, 2, 1)), encoder_b   # .transpose(1,2).contiguous()

    def forward(self, tgt_encodings, encoder_out_dict, prev_tokens_with_encodings,
                share_embed_table, output_lm_logits=False, impl="pallas"):
        # Encoder outputs / src_tokens would only feed the attention layers, which do
        # not exist (empty ModuleList) -> consumed for parity only.
        _src_tokens = encoder_out_dict["src_tokens"]
        _enc_a, _enc_b = self._split_encoder_out(encoder_out_dict["encoder_out"])

        # TODO(synk): share_embed_model is an external HuggingFace seq2seq model; modeled
        # here as an embedding lookup (encoder_last_hidden_state) with a tied lm_head.
        prev_ids = np.asarray(prev_tokens_with_encodings["input_ids"])
        table = jnp.asarray(share_embed_table, jnp.float32)
        embed = jnp.take(table, jnp.asarray(prev_ids, jnp.int32), axis=0)   # (B, Tp, D) on device

        lm_logits = None
        if output_lm_logits:
            lm_logits = jax.nn.log_softmax(embed @ table.T, axis=-1)

        # Subsequence mask: host-side integer logic on host numpy ids (no device sync).
        bsz = prev_ids.shape[0]
        tgt_mask = find_subsequence_indices_np(
            np.asarray(tgt_encodings["input_ids"]), prev_ids)
        counts = (tgt_mask == 1).sum(axis=1)
        assert np.all(counts == counts[0]), "ragged subsequence selection not supported"
        flat_idx = np.nonzero(tgt_mask.reshape(-1) == 1)[0].astype(np.int32)

        # Device-side gather of the selected rows (no device->host embedding round trip).
        x = jnp.take(embed.reshape(-1, embed.shape[-1]), jnp.asarray(flat_idx), axis=0)
        x = x.reshape(bsz, int(counts[0]), embed.shape[-1]).astype(jnp.float32)

        if impl == "pallas":
            out = decoder_hot_path(x, self.fused)
        elif impl == "fused_ref":
            out = decoder_hot_path_ref(x, self.fused)
        else:
            out = decoder_ref_unfused(x, self.raw)
        return out, lm_logits


# ----------------------------------------------------------------------------
# Main
# ----------------------------------------------------------------------------
if __name__ == "__main__":
    key = jax.random.PRNGKey(0)
    k_embed, k_model, k_enc, k_perturb = jax.random.split(key, 4)

    SHARE_VOCAB, D = 64, 32       # share_embed_model hidden size / vocab
    DICT_SIZE = 128               # len(dictionary) -> fc2 output width (lane-dense)
    B = 2

    share_embed_table = jax.random.normal(k_embed, (SHARE_VOCAB, D), jnp.float32) * 0.5

    # ids chosen so each row of the subsequence mask selects the same count (7 positions)
    tgt_ids = np.array([[1, 10, 11, 12, 13, 14],
                        [1, 20, 21, 22, 23, 24]], dtype=np.int32)
    prev_ids = np.array([[5, 6, 10, 11, 12, 13, 14, 7, 8, 9],
                         [3, 6, 20, 21, 22, 23, 24, 7, 8, 2]], dtype=np.int32)
    tgt_encodings = {"input_ids": tgt_ids}
    prev_tokens_with_encodings = {"input_ids": prev_ids,
                                  "attention_mask": np.ones_like(prev_ids)}

    # dummy encoder outputs (only consumed by _split_encoder_out / the absent attention)
    Tenc = 8
    enc_a = jax.random.normal(k_enc, (B, Tenc, D), jnp.float32)
    enc_b = (enc_a + 1.0) * math.sqrt(0.5)
    encoder_out_dict = {"src_tokens": jnp.asarray(prev_ids[:, :Tenc], jnp.int32),
                        "encoder_out": (enc_a, enc_b)}

    dec = Decoder(k_model, vocab_size=DICT_SIZE, embed_dim=D,
                  convolutions=((16, 3),) * 2, dropout=0.1)

    # Perturb LayerNorm affine / biases away from their identity init so the folded
    # affine + bias paths of the fusion are numerically exercised by the checks.
    kw, kb, k1, k2, kg = jax.random.split(k_perturb, 5)
    dec.raw["ln_w"] = 1.0 + 0.1 * jax.random.normal(kw, (1, D), jnp.float32)
    dec.raw["ln_b"] = 0.05 * jax.random.normal(kb, (1, D), jnp.float32)
    dec.raw["fc1_b"] = 0.05 * jax.random.normal(k1, dec.raw["fc1_b"].shape, jnp.float32)
    dec.raw["fc2_b"] = 0.05 * jax.random.normal(k2, dec.raw["fc2_b"].shape, jnp.float32)
    dec.raw["fcg_b"] = 0.05 * jax.random.normal(kg, (1, 1), jnp.float32)
    dec.rebuild_fused()

    out, lm_logits = dec.forward(tgt_encodings, encoder_out_dict,
                                 prev_tokens_with_encodings, share_embed_table,
                                 output_lm_logits=True, impl="pallas")
    jax.block_until_ready(out)

    # 1) kernel vs. plain-JAX reference of the SAME fused bf16 math (tight)
    ref_fused, _ = dec.forward(tgt_encodings, encoder_out_dict,
                               prev_tokens_with_encodings, share_embed_table,
                               impl="fused_ref")
    np.testing.assert_allclose(np.asarray(out), np.asarray(ref_fused),
                               rtol=2e-3, atol=2e-3)

    # 2) kernel vs. exact unfused f32 module math (validates the algebraic fusion;
    #    looser tolerance covers the bf16 matmul policy)
    ref_full, _ = dec.forward(tgt_encodings, encoder_out_dict,
                              prev_tokens_with_encodings, share_embed_table,
                              impl="unfused_ref")
    np.testing.assert_allclose(np.asarray(out), np.asarray(ref_full),
                               rtol=5e-2, atol=5e-2)

    print("KERNEL_OK")
</pallas_src>

<mosaic_0001>
module attributes {stable_mosaic.version = 11 : i64} {
  func.func @decoder_kernel(%arg0: i32, %arg1: memref<16x32xf32, #tpu.memory_space<vmem>>, %arg2: memref<32x128xbf16, #tpu.memory_space<vmem>>, %arg3: memref<1x128xf32, #tpu.memory_space<vmem>>, %arg4: memref<1x32xf32, #tpu.memory_space<vmem>>, %arg5: memref<1x1xf32, #tpu.memory_space<smem>>, %arg6: memref<16x128xf32, #tpu.memory_space<vmem>>) attributes {dimension_semantics = [#tpu.dimension_semantics<parallel>], iteration_bounds = array<i64: 1>, scalar_prefetch = 0 : i64, scratch_operands = 0 : i64, tpu.core_type = #tpu.core_type<tc>, window_params = [{transform_indices = @transform_0, window_bounds = array<i64: 16, 32>}, {pipeline_mode = #tpu.pipeline_mode<synchronous>, transform_indices = @transform_1, window_bounds = array<i64: 32, 128>}, {pipeline_mode = #tpu.pipeline_mode<synchronous>, transform_indices = @transform_2, window_bounds = array<i64: 1, 128>}, {pipeline_mode = #tpu.pipeline_mode<synchronous>, transform_indices = @transform_3, window_bounds = array<i64: 1, 32>}, {transform_indices = @transform_4, window_bounds = array<i64: 1, 1>}, {transform_indices = @transform_5, window_bounds = array<i64: 16, 128>}]} {
    %c0 = arith.constant 0 : index
    %c0_0 = arith.constant 0 : index
    %0 = vector.load %arg1[%c0, %c0_0] : memref<16x32xf32, #tpu.memory_space<vmem>>, vector<16x32xf32>
    %cst = arith.constant dense<0.000000e+00> : vector<16xf32>
    %1 = vector.multi_reduction <add>, %0, %cst [1] : vector<16x32xf32> to vector<16xf32>
    %2 = vector.shape_cast %1 : vector<16xf32> to vector<16x1xf32>
    %cst_1 = arith.constant 3.200000e+01 : f32
    %3 = vector.broadcast %cst_1 : f32 to vector<16x1xf32>
    %4 = arith.divf %2, %3 : vector<16x1xf32>
    %5 = arith.mulf %0, %0 : vector<16x32xf32>
    %cst_2 = arith.constant dense<0.000000e+00> : vector<16xf32>
    %6 = vector.multi_reduction <add>, %5, %cst_2 [1] : vector<16x32xf32> to vector<16xf32>
    %7 = vector.shape_cast %6 : vector<16xf32> to vector<16x1xf32>
    %cst_3 = arith.constant 3.200000e+01 : f32
    %8 = vector.broadcast %cst_3 : f32 to vector<16x1xf32>
    %9 = arith.divf %7, %8 : vector<16x1xf32>
    %10 = arith.mulf %4, %4 : vector<16x1xf32>
    %11 = arith.subf %9, %10 : vector<16x1xf32>
    %cst_4 = arith.constant 0.000000e+00 : f32
    %12 = vector.broadcast %cst_4 : f32 to vector<16x1xf32>
    %13 = arith.maximumf %11, %12 : vector<16x1xf32>
    %14 = vector.broadcast %4 : vector<16x1xf32> to vector<16x32xf32>
    %15 = arith.subf %0, %14 : vector<16x32xf32>
    %cst_5 = arith.constant 9.99999974E-6 : f32
    %16 = vector.broadcast %cst_5 : f32 to vector<16x1xf32>
    %17 = arith.addf %13, %16 : vector<16x1xf32>
    %18 = math.rsqrt %17 : vector<16x1xf32>
    %19 = vector.broadcast %18 : vector<16x1xf32> to vector<16x32xf32>
    %20 = arith.mulf %15, %19 : vector<16x32xf32>
    %c0_6 = arith.constant 0 : index
    %c0_7 = arith.constant 0 : index
    %21 = vector.load %arg4[%c0_6, %c0_7] : memref<1x32xf32, #tpu.memory_space<vmem>>, vector<1x32xf32>
    %22 = vector.broadcast %21 : vector<1x32xf32> to vector<16x32xf32>
    %23 = arith.mulf %20, %22 : vector<16x32xf32>
    %cst_8 = arith.constant dense<0.000000e+00> : vector<16xf32>
    %24 = vector.multi_reduction <add>, %23, %cst_8 [1] : vector<16x32xf32> to vector<16xf32>
    %25 = vector.shape_cast %24 : vector<16xf32> to vector<16x1xf32>
    %c0_9 = arith.constant 0 : index
    %c0_10 = arith.constant 0 : index
    %26 = memref.load %arg5[%c0_9, %c0_10] : memref<1x1xf32, #tpu.memory_space<smem>>
    %27 = vector.broadcast %26 : f32 to vector<16x1xf32>
    %28 = arith.addf %25, %27 : vector<16x1xf32>
    %29 = arith.negf %28 : vector<16x1xf32>
    %30 = math.exp %29 : vector<16x1xf32>
    %cst_11 = arith.constant 1.000000e+00 : f32
    %31 = vector.broadcast %cst_11 : f32 to vector<16x1xf32>
    %32 = arith.addf %31, %30 : vector<16x1xf32>
    %33 = arith.divf %31, %32 : vector<16x1xf32>
    %34 = arith.truncf %20 : vector<16x32xf32> to vector<16x32xbf16>
    %c0_12 = arith.constant 0 : index
    %c0_13 = arith.constant 0 : index
    %35 = vector.load %arg2[%c0_12, %c0_13] : memref<32x128xbf16, #tpu.memory_space<vmem>>, vector<32x128xbf16>
    %cst_14 = arith.constant dense<0.000000e+00> : vector<16x128xf32>
    %36 = tpu.matmul %34, %35, %cst_14 {dimension_numbers = #tpu.dot_dimension_numbers<[1], [0], [0], [1], [0, 0, 1, 1], [], []>} : vector<16x32xbf16>, vector<32x128xbf16>, vector<16x128xf32> -> vector<16x128xf32>
    %c0_15 = arith.constant 0 : index
    %c0_16 = arith.constant 0 : index
    %37 = vector.load %arg3[%c0_15, %c0_16] : memref<1x128xf32, #tpu.memory_space<vmem>>, vector<1x128xf32>
    %38 = vector.broadcast %37 : vector<1x128xf32> to vector<16x128xf32>
    %39 = arith.addf %36, %38 : vector<16x128xf32>
    %cst_17 = arith.constant dense<0xFF800000> : vector<16xf32>
    %40 = vector.multi_reduction <maximumf>, %39, %cst_17 [1] : vector<16x128xf32> to vector<16xf32>
    %41 = vector.shape_cast %40 : vector<16xf32> to vector<16x1xf32>
    %42 = vector.broadcast %41 : vector<16x1xf32> to vector<16x128xf32>
    %43 = arith.subf %39, %42 : vector<16x128xf32>
    %44 = math.exp %43 : vector<16x128xf32>
    %cst_18 = arith.constant dense<0.000000e+00> : vector<16xf32>
    %45 = vector.multi_reduction <add>, %44, %cst_18 [1] : vector<16x128xf32> to vector<16xf32>
    %46 = vector.shape_cast %45 : vector<16xf32> to vector<16x1xf32>
    %47 = tpu.reciprocal %46 {approx = true} : vector<16x1xf32> -> vector<16x1xf32>
    %48 = vector.broadcast %47 : vector<16x1xf32> to vector<16x128xf32>
    %49 = arith.mulf %44, %48 : vector<16x128xf32>
    %50 = vector.broadcast %33 : vector<16x1xf32> to vector<16x128xf32>
    %51 = arith.mulf %49, %50 : vector<16x128xf32>
    %cst_19 = arith.constant 1.000000e-32 : f32
    %52 = vector.broadcast %cst_19 : f32 to vector<16x128xf32>
    %53 = arith.addf %51, %52 : vector<16x128xf32>
    %54 = math.log %53 : vector<16x128xf32>
    %c0_20 = arith.constant 0 : index
    %c0_21 = arith.constant 0 : index
    %55 = vector.load %arg6[%c0_20, %c0_21] : memref<16x128xf32, #tpu.memory_space<vmem>>, vector<16x128xf32>
    tpu.vector_store %arg6[%c0_20, %c0_21], %54 {strides = array<i32>} : memref<16x128xf32, #tpu.memory_space<vmem>>, vector<16x128xf32>,
    return
  }
  func.func @transform_0(%arg0: i32) -> (i32, i32) {
    %c0_i32 = arith.constant 0 : i32
    %c0_i32_0 = arith.constant 0 : i32
    return %arg0, %c0_i32 : i32, i32
  }
  func.func @transform_1(%arg0: i32) -> (i32, i32) {
    %c0_i32 = arith.constant 0 : i32
    %c0_i32_0 = arith.constant 0 : i32
    %c0_i32_1 = arith.constant 0 : i32
    return %c0_i32, %c0_i32_0 : i32, i32
  }
  func.func @transform_2(%arg0: i32) -> (i32, i32) {
    %c0_i32 = arith.constant 0 : i32
    %c0_i32_0 = arith.constant 0 : i32
    %c0_i32_1 = arith.constant 0 : i32
    return %c0_i32, %c0_i32_0 : i32, i32
  }
  func.func @transform_3(%arg0: i32) -> (i32, i32) {
    %c0_i32 = arith.constant 0 : i32
    %c0_i32_0 = arith.constant 0 : i32
    %c0_i32_1 = arith.constant 0 : i32
    return %c0_i32, %c0_i32_0 : i32, i32
  }
  func.func @transform_4(%arg0: i32) -> (i32, i32) {
    %c0_i32 = arith.constant 0 : i32
    %c0_i32_0 = arith.constant 0 : i32
    %c0_i32_1 = arith.constant 0 : i32
    return %c0_i32, %c0_i32_0 : i32, i32
  }
  func.func @transform_5(%arg0: i32) -> (i32, i32) {
    %c0_i32 = arith.constant 0 : i32
    %c0_i32_0 = arith.constant 0 : i32
    return %arg0, %c0_i32 : i32, i32
  }
}

</mosaic_0001>

<llo_original>
// kernel: tpu_custom_call.1
$region0: #{tpu_custom_call.1}
  #allocation0 [shape = 'u32[]', space=smem, size = 0x4, offset = 0x4, fixed_abs, tag = 'smem constant byte address 0x4 - core index']
  #allocation1 [shape = 'u32[144,128]{1,0:T(1,128)}', space=vmem, size = 0x12000, scoped, tag = 'internal scratch']
  #allocation2 [shape = 'f32[1,1]{1,0:T(1,128)S(6)}', space=smem, size = 0x200, scoped, tag = 'scoped memory for tpu_custom_call.1']
  %s0 = inlined_call_operand.hbm [shape: f32[16,32], index: 0, kind: input, shape index: {}]
  %s1 = inlined_call_operand.hbm [shape: bf16[32,128], index: 1, kind: input, shape index: {}]
  %s2 = inlined_call_operand.vmem [shape: f32[1,128], index: 2, kind: input, shape index: {}]
  %s3 = inlined_call_operand.vmem [shape: f32[1,32], index: 3, kind: input, shape index: {}]
  %s4 = inlined_call_operand.<no memory space> [shape: f32[1,1], index: 4, kind: input, shape index: {}]
  %s5 = inlined_call_operand.hbm [shape: f32[16,128], index: 5, kind: output, shape index: {}]
  %s6 = sld [smem:[#allocation0]]
  $region38: #{tpu_custom_call.1} parent=0
    _
  %s8 = ssub.s32 1, %s6
  %s9 = scalar_select 0, %s8, %s6
  %10 = sst [smem:[#allocation2]] %s4
  $region1: #{tpu_custom_call.1} parent=0
    #allocation3 [shape = 'u8[8192]{0}', space=vmem, size = 0x2000, scoped, tag = 'input window, operand 0, single buffered']
    #allocation4 [shape = 's32[1]{0}', space=sflag, size = 0x4, scoped, tag = 'scoped memory for tpu_custom_call.1']
    #allocation5 [shape = 's32[1]{0}', space=sflag, size = 0x4, scoped, tag = 'scoped memory for tpu_custom_call.1']
    #allocation6 [shape = 'u8[8192]{0}', space=vmem, size = 0x2000, scoped, tag = 'input window, operand 1, single buffered']
    #allocation7 [shape = 's32[1]{0}', space=sflag, size = 0x4, scoped, tag = 'scoped memory for tpu_custom_call.1']
    #allocation8 [shape = 'u8[8192]{0}', space=vmem, size = 0x2000, scoped, tag = 'output window, operand 0, single buffered']
    %11 = vsyncpa [#allocation4], 0
    %12 = vsyncpa [#allocation7], 0
    %13 = vsyncpa [#allocation5], 0
    // Predicated region
    $region2: #{tpu_custom_call.1} parent=1 // pred_check
      _
    $region3: #{tpu_custom_call.1} parent=1 // pred_check_branch
      %15 = sbr.rel (0) target = $region5
    $region4: #{tpu_custom_call.1} parent=1 // pred_region
      %s17 = ssub.s32 256, 256
      %18 = vsyncadd [#allocation4], %s17
      %s19 = sshll.u32 [#allocation3], 4
      %s20 = int_to_ptr.vmem [resolvable:$true] %s19
      %25 = dma.hbm_to_vmem [thread:$0]  %s0, 256, %s20, [#allocation4], 128, 128, 8
    $region5: #{tpu_custom_call.1} parent=1 // pred_fallthru
      _
    // Predicated region
    $region6: #{tpu_custom_call.1} parent=1 // pred_check
      _
    $region7: #{tpu_custom_call.1} parent=1 // pred_check_branch
      %27 = sbr.rel (0) target = $region9
    $region8: #{tpu_custom_call.1} parent=1 // pred_region
      %s29 = ssub.s32 256, 256
      %30 = vsyncadd [#allocation7], %s29
      %s31 = sshll.u32 [#allocation6], 4
      %s32 = int_to_ptr.vmem [resolvable:$true] %s31
      %37 = dma.hbm_to_vmem [thread:$0]  %s1, 256, %s32, [#allocation7], 64, 64, 4
    $region9: #{tpu_custom_call.1} parent=1 // pred_fallthru
      _
    // Predicated region
    $region10: #{tpu_custom_call.1} parent=1 // pred_check
      _
    $region11: #{tpu_custom_call.1} parent=1 // pred_check_branch
      %39 = sbr.rel (0) target = $region13
    $region12: #{tpu_custom_call.1} parent=1 // pred_region
      _
    $region13: #{tpu_custom_call.1} parent=1 // pred_fallthru
      _
    // Predicated region
    $region14: #{tpu_custom_call.1} parent=1 // pred_check
      _
    $region15: #{tpu_custom_call.1} parent=1 // pred_check_branch
      %41 = sbr.rel (0) target = $region17
    $region16: #{tpu_custom_call.1} parent=1 // pred_region
      _
    $region17: #{tpu_custom_call.1} parent=1 // pred_fallthru
      _
    // Predicated region
    $region18: #{tpu_custom_call.1} parent=1 // pred_check
      _
    $region19: #{tpu_custom_call.1} parent=1 // pred_check_branch
      %43 = sbr.rel (0) target = $region21
    $region20: #{tpu_custom_call.1} parent=1 // pred_region
      _
    $region21: #{tpu_custom_call.1} parent=1 // pred_fallthru
      _
    // Predicated region
    $region22: #{tpu_custom_call.1} parent=1 // pred_check
      _
    $region23: #{tpu_custom_call.1} parent=1 // pred_check_branch
      %45 = sbr.rel (0) target = $region25
    $region24: #{tpu_custom_call.1} parent=1 // pred_region
      %46 = dma.done [#allocation4], 256
    $region25: #{tpu_custom_call.1} parent=1 // pred_fallthru
      _
    // Predicated region
    $region26: #{tpu_custom_call.1} parent=1 // pred_check
      _
    $region27: #{tpu_custom_call.1} parent=1 // pred_check_branch
      %48 = sbr.rel (0) target = $region29
    $region28: #{tpu_custom_call.1} parent=1 // pred_region
      %49 = dma.done [#allocation7], 256
    $region29: #{tpu_custom_call.1} parent=1 // pred_fallthru
      _
    %v51 = vld [vmem:[#allocation3] sm:$0xff]
    %v52 = vld [vmem:[#allocation3 + $0x8] sm:$0xff]
    %vm53 = vcmask 261120
    %v54 = vsel %vm53, %v51, 0.0
    %55 = vadd.xlane.f32.xlu0 %v54
    %v56 = vpop.xlane.xlu0 %55
    %v57 = vsel %vm53, %v52, 0.0
    %58 = vadd.xlane.f32.xlu0 %v57
    %v59 = vpop.xlane.xlu0 %58
    %v60 = vrcp.pop 32.0
    %v61 = vmul.f32 %v56, %v60
    %v62 = vmul.f32 %v59, %v60
    %v63 = vmul.f32 %v51, %v51
    %v64 = vmul.f32 %v52, %v52
    %v65 = vsel %vm53, %v63, 0.0
    %66 = vadd.xlane.f32.xlu0 %v65
    %v67 = vpop.xlane.xlu0 %66
    %v68 = vsel %vm53, %v64, 0.0
    %69 = vadd.xlane.f32.xlu0 %v68
    %v70 = vpop.xlane.xlu0 %69
    %v71 = vmul.f32 %v67, %v60
    %v72 = vmul.f32 %v70, %v60
    %v73 = vmul.f32 %v61, %v61
    %v74 = vmul.f32 %v62, %v62
    %v75 = vsub.f32 %v71, %v73
    %v76 = vsub.f32 %v72, %v74
    %v77 = vmax.f32 %v75, 0.0
    %v78 = vmax.f32 %v76, 0.0
    %v79 = vsub.f32 %v51, %v61
    %v80 = vsub.f32 %v52, %v62
    %v81 = vadd.f32 %v77, 1e-05
    %v82 = vadd.f32 %v78, 1e-05
    %v83 = vrsqrt.pop %v81
    %v84 = vrsqrt.pop %v82
    %v85 = vmul.f32 %v79, %v83
    %v86 = vmul.f32 %v80, %v84
    %v87 = vld [vmem:[%s3] sm:$0x1]
    %v89 = vlaneseq
    %v90 = vshrl.u32 %v89, 7
    %v91 = vsub.s32 0, %v90
    %v92 = vrot.slane %v87, %v91
    %v94 = vmul.f32 %v85, %v92
    %v95 = vmul.f32 %v86, %v92
    %v96 = vsel %vm53, %v94, 0.0
    %97 = vadd.xlane.f32.xlu0 %v96
    %v98 = vpop.xlane.xlu0 %97
    %v99 = vsel %vm53, %v95, 0.0
    %100 = vadd.xlane.f32.xlu0 %v99
    %v101 = vpop.xlane.xlu0 %100
    %s102 = sld [smem:[#allocation2]]
    %v103 = vstv %s102
    %v104 = vadd.f32 %v98, %v103
    %v105 = vadd.f32 %v101, %v103
    %v106 = vxor.u32 %v104, 2147483648
    %v107 = vxor.u32 %v105, 2147483648
    %v108 = vmul.f32 %v106, 1.442695
    %v109 = vpow.pop %v108
    %v110 = vmul.f32 %v107, 1.442695
    %v111 = vpow.pop %v110
    %v112 = vadd.f32 %v109, 1.0
    %v113 = vadd.f32 %v111, 1.0
    %v114 = vrcp.pop %v112
    %v115 = vmul.f32 1.0, %v114
    %v116 = vrcp.pop %v113
    %v117 = vmul.f32 1.0, %v116
    %v118 = vpack.c.bf16 %v86, %v85
    %v119 = vld [vmem:[#allocation6] sm:$0xf]
    %v120 = vld [vmem:[#allocation6 + $0x4] sm:$0xf]
    %v121 = vld [vmem:[#allocation6 + $0x8] sm:$0xf]
    %v122 = vld [vmem:[#allocation6 + $0xc] sm:$0xf]
    %v123 = vld [vmem:[%s2] sm:$0x1]
    %v125 = vlaneseq
    %v126 = vshrl.u32 %v125, 7
    %v127 = vsub.s32 0, %v126
    %v128 = vrot.slane %v123, %v127
    %v134 = vunpack.c.l.b16 %v119
    %v135 = vunpack.c.l.b16 %v120
    %v136 = vunpack.c.l.b16 %v121
    %v137 = vunpack.c.l.b16 %v122
    %v138 = vpack.c.b16 %v135, %v134
    %v139 = vpack.c.b16 %v137, %v136
    %v143 = vsel %vm53, %v118, 0
    %145 = vmatprep.subr.bf16.mxu0 0
    %146 = vmatpush1.bf16.msra.mxu0 0
    %147 = vmatprep.subr.bf16.mxu0 0
    %148 = vmatpush1.bf16.msra.mxu0 0
    %149 = vmatprep.subr.bf16.mxu0 0
    %150 = vmatpush1.bf16.msra.mxu0 0
    %151 = vmatprep.subr.bf16.mxu0 0
    %152 = vmatpush1.bf16.msra.mxu0 0
    %153 = vmatprep.subr.bf16.mxu0 0
    %154 = vmatpush1.bf16.msra.mxu0 0
    %155 = vmatprep.subr.bf16.mxu0 0
    %156 = vmatpush1.bf16.msra.mxu0 0
    %157 = vmatprep.subr.bf16.mxu0 0
    %158 = vmatpush1.bf16.msra.mxu0 %v139
    %159 = vmatprep.subr.bf16.mxu0 0
    %160 = vmatpush1.bf16.msra.mxu0 %v138
    %161 = vmatprep.subr.bf16.mxu0 0
    %162 = vmatpush2.bf16.msra.mxu0 0
    %163 = vmatprep.subr.bf16.mxu0 0
    %164 = vmatpush2.bf16.msra.mxu0 0
    %165 = vmatprep.subr.bf16.mxu0 0
    %166 = vmatpush2.bf16.msra.mxu0 0
    %167 = vmatprep.subr.bf16.mxu0 0
    %168 = vmatpush2.bf16.msra.mxu0 0
    %169 = vmatprep.subr.bf16.mxu0 0
    %170 = vmatpush2.bf16.msra.mxu0 0
    %171 = vmatprep.subr.bf16.mxu0 0
    %172 = vmatpush2.bf16.msra.mxu0 0
    %173 = vmatprep.subr.bf16.mxu0 0
    %174 = vmatpush2.bf16.msra.mxu0 0
    %175 = vmatprep.subr.bf16.mxu0 0
    %176 = vmatpush2.bf16.msra.mxu0 0
    %177 = vmatprep.mubr.bf16.mxu0 0
    %178 = vmatmul.mubr.bf16.gmra.mxu0 %v143
    %v179 = vpop.f32.mrf.mxu0
    %v180 = vadd.f32 %v128, %v179
    %v181 = vpop.f32.mrf.mxu0
    %v182 = vpop.f32.mrf.mxu0
    %v183 = vadd.f32 %v128, %v182
    %v184 = vpop.f32.mrf.mxu0
    %185 = vdwg.mxu0
    %186 = vmax.xlane.f32.xlu0 %v180
    %v187 = vpop.xlane.xlu0 %186
    %188 = vmax.xlane.f32.xlu0 %v183
    %v189 = vpop.xlane.xlu0 %188
    %v190 = vsub.f32 %v180, %v187
    %v191 = vsub.f32 %v183, %v189
    %v192 = vmul.f32 %v190, 1.442695
    %v193 = vpow.pop %v192
    %v194 = vmul.f32 %v191, 1.442695
    %v195 = vpow.pop %v194
    %196 = vadd.xlane.f32.xlu0 %v193
    %v197 = vpop.xlane.xlu0 %196
    %198 = vadd.xlane.f32.xlu0 %v195
    %v199 = vpop.xlane.xlu0 %198
    %v200 = vrcp.pop %v197
    %v201 = vrcp.pop %v199
    %v202 = vmul.f32 %v193, %v200
    %v203 = vmul.f32 %v195, %v201
    %v204 = vmul.f32 %v202, %v115
    %v205 = vmul.f32 %v203, %v117
    %v206 = vadd.f32 %v204, 1e-32
    %v207 = vadd.f32 %v205, 1e-32
    %v208 = vlog2.pop %v206
    %v209 = vmul.f32 %v208, 0.6931472
    %v210 = vlog2.pop %v207
    %v211 = vmul.f32 %v210, 0.6931472
    %212 = vst [vmem:[#allocation8] sm:$0xff] %v209
    %213 = vst [vmem:[#allocation8 + $0x8] sm:$0xff] %v211
    // Predicated region
    $region30: #{tpu_custom_call.1} parent=1 // pred_check
      _
    $region31: #{tpu_custom_call.1} parent=1 // pred_check_branch
      %215 = sbr.rel (0) target = $region33
    $region32: #{tpu_custom_call.1} parent=1 // pred_region
      %s217 = ssub.s32 256, 256
      %218 = vsyncadd [#allocation5], %s217
      %s219 = sshll.u32 [#allocation8], 4
      %s220 = int_to_ptr.vmem [resolvable:$true] %s219
      %225 = dma.vmem_to_hbm [thread:$0]  %s220, 256, %s5, [#allocation5], 128, 128, 8
    $region33: #{tpu_custom_call.1} parent=1 // pred_fallthru
      _
    // Predicated region
    $region34: #{tpu_custom_call.1} parent=1 // pred_check
      _
    $region35: #{tpu_custom_call.1} parent=1 // pred_check_branch
      %227 = sbr.rel (0) target = $region37
    $region36: #{tpu_custom_call.1} parent=1 // pred_region
      %228 = dma.done [#allocation5], 256
    $region37: #{tpu_custom_call.1} parent=1 // pred_fallthru
      _
    %229 = vsyncpa [#allocation4], 1
    %230 = vsyncpa [#allocation7], 1
    %231 = vsyncpa [#allocation5], 1

</llo_original>
